<compile_context>
chip_gen: v7x
topology: tpu7x:2x2x1
jax: 0.10.0
libtpu: 0.0.40
codegen_flags: <defaults>
</compile_context>

<pallas_src>
import jax
import jax.numpy as jnp
from jax.experimental import pallas as pl
from jax.experimental.pallas import tpu as pltpu


# ---------------------------------------------------------------------------
# Kernel
# ---------------------------------------------------------------------------
def mlp_kernel(x_ref,
               w1, b1, w2, b2, w3, b3, w4, b4, w5, b5,
               o_ref):
    # Input arrives as f32; cast to bf16 only for the MXU operands.
    h = x_ref[...].astype(jnp.bfloat16)          # (TILE_B, F)

    def layer(h_bf16, w_r, b_r):
        # MXU matmul on bf16 operands, f32 accumulation; bias/ReLU in f32.
        y = jnp.dot(h_bf16, w_r[...], preferred_element_type=jnp.float32)
        y = y + b_r[...]
        return jnp.maximum(y, 0.0)

    h = layer(h, w1, b1).astype(jnp.bfloat16)    # F   -> 128
    h = layer(h, w2, b2).astype(jnp.bfloat16)    # 128 -> 256
    h = layer(h, w3, b3).astype(jnp.bfloat16)    # 256 -> 128
    h = layer(h, w4, b4).astype(jnp.bfloat16)    # 128 -> 128 (64 zero-padded)

    logits = jnp.dot(h, w5[...], preferred_element_type=jnp.float32) + b5[...]
    o_ref[...] = jax.nn.sigmoid(logits)          # f32, only the real F lanes


# ---------------------------------------------------------------------------
# Parameter construction / preparation
# ---------------------------------------------------------------------------
def init_params(key, input_size):
    """Deterministic synthetic parameters matching TrainNN's shapes."""
    dims = [input_size, 128, 256, 128, 64, input_size]
    eps = 1e-5
    params = []
    keys = jax.random.split(key, 5 * 4)
    ki = 0
    for li in range(5):
        fan_in, fan_out = dims[li], dims[li + 1]
        w = jax.random.normal(keys[ki], (fan_in, fan_out), jnp.float32) / jnp.sqrt(
            jnp.float32(fan_in)); ki += 1
        b = 0.01 * jax.random.normal(keys[ki], (1, fan_out), jnp.float32); ki += 1
        params.append(w)
        params.append(b)
        if li < 4:  # BatchNorm1d follows the first four Linear+ReLU blocks
            gamma = 1.0 + 0.1 * jax.random.normal(keys[ki], (1, fan_out), jnp.float32); ki += 1
            beta = 0.1 * jax.random.normal(keys[ki], (1, fan_out), jnp.float32); ki += 1
            running_mean = jnp.zeros((1, fan_out), jnp.float32)
            running_var = jnp.ones((1, fan_out), jnp.float32)
            scale = gamma / jnp.sqrt(running_var + eps)
            shift = beta - running_mean * scale
            params.append(scale)
            params.append(shift)
        else:
            ki += 2
    return params  # [w1,b1,s1,t1, w2,b2,s2,t2, w3,b3,s3,t3, w4,b4,s4,t4, w5,b5]


def fold_bn(params):
    """Fold eval-mode BN scale/shift into the NEXT Linear's weights/bias.

    (relu(h@W+b) * s + t) @ W' + b'  ==  relu(h@W+b) @ (s.T * W') + (t @ W' + b')
    Valid because Dropout is identity and BN is affine (eval mode).
    """
    (w1, b1, s1, t1, w2, b2, s2, t2,
     w3, b3, s3, t3, w4, b4, s4, t4, w5, b5) = params
    ws = [w1]
    bs = [b1]
    for s, t, w, b in [(s1, t1, w2, b2), (s2, t2, w3, b3),
                       (s3, t3, w4, b4), (s4, t4, w5, b5)]:
        ws.append(s.reshape(-1, 1) * w)
        bs.append(b + t @ w)
    return ws, bs  # 5 weights, 5 biases (f32)


def _round_up(n, m):
    return ((n + m - 1) // m) * m


def pad_internal(ws, bs):
    """Zero-pad only the INTERNAL hidden dims up to multiples of 128.

    The first layer's K dim stays at the real input size F (x is fed unpadded)
    and the last layer's N dim stays at F (output written unpadded).
    """
    n = len(ws)
    ws_p, bs_p = [], []
    for li, (w, b) in enumerate(zip(ws, bs)):
        fi, fo = w.shape
        fip = fi if li == 0 else _round_up(fi, 128)
        fop = fo if li == n - 1 else _round_up(fo, 128)
        ws_p.append(jnp.pad(w, ((0, fip - fi), (0, fop - fo))))
        bs_p.append(jnp.pad(b, ((0, 0), (0, fop - fo))))
    return ws_p, bs_p


# ---------------------------------------------------------------------------
# Wrapper
# ---------------------------------------------------------------------------
def train_nn_forward(x, params, *, tile_b=1024):
    B, F = x.shape

    ws, bs = fold_bn(params)
    ws_p, bs_p = pad_internal(ws, bs)
    ws_p = [w.astype(jnp.bfloat16) for w in ws_p]   # MXU operands in bf16

    # Clamp the tile to the real batch (padding <= one sublane-rounded tile).
    tile_b_eff = min(tile_b, _round_up(B, 8))
    # Keep >=2 grid steps for large batches so v7x megacore has work on both
    # TensorCores and input/output DMA can overlap compute.
    if B >= 512 and _round_up(B, tile_b_eff) // tile_b_eff < 2:
        tile_b_eff = _round_up((B + 1) // 2, 8)

    B_pad = _round_up(B, tile_b_eff)
    x_p = x if B_pad == B else jnp.pad(x, ((0, B_pad - B), (0, 0)))

    resident = lambda i: (0, 0)  # weights/biases: same block every step -> no re-DMA
    in_specs = [pl.BlockSpec((tile_b_eff, F), lambda i: (i, 0))]
    flat_params = []
    for w, b in zip(ws_p, bs_p):
        in_specs.append(pl.BlockSpec(w.shape, resident))
        in_specs.append(pl.BlockSpec(b.shape, resident))
        flat_params.extend([w, b])

    out = pl.pallas_call(
        mlp_kernel,
        out_shape=jax.ShapeDtypeStruct((B_pad, F), jnp.float32),
        grid=(B_pad // tile_b_eff,),
        in_specs=in_specs,
        out_specs=pl.BlockSpec((tile_b_eff, F), lambda i: (i, 0)),
        compiler_params=pltpu.CompilerParams(
            dimension_semantics=("parallel",)),   # megacore sharding on v7x
    )(x_p, *flat_params)

    return out[:B] if B_pad != B else out


# ---------------------------------------------------------------------------
# References
# ---------------------------------------------------------------------------
def reference_forward_f32(x, params):
    """Original module semantics (eval mode), all f32."""
    (w1, b1, s1, t1, w2, b2, s2, t2,
     w3, b3, s3, t3, w4, b4, s4, t4, w5, b5) = params

    def block(h, w, b, s, t):
        y = jnp.maximum(h @ w + b, 0.0)
        return y * s + t                      # Dropout -> identity in eval mode

    h = block(x, w1, b1, s1, t1)
    h = block(h, w2, b2, s2, t2)
    h = block(h, w3, b3, s3, t3)
    h = block(h, w4, b4, s4, t4)
    return jax.nn.sigmoid(h @ w5 + b5)


def reference_forward_bf16(x, ws, bs):
    """Matches kernel arithmetic: bf16 matmul operands, f32 accumulate/elementwise."""
    h = x.astype(jnp.bfloat16)
    for l in range(4):
        y = jnp.dot(h, ws[l].astype(jnp.bfloat16),
                    preferred_element_type=jnp.float32) + bs[l]
        h = jnp.maximum(y, 0.0).astype(jnp.bfloat16)
    logits = jnp.dot(h, ws[4].astype(jnp.bfloat16),
                     preferred_element_type=jnp.float32) + bs[4]
    return jax.nn.sigmoid(logits)


if __name__ == "__main__":
    batch = 8
    input_size = 32

    key = jax.random.PRNGKey(0)
    kx, kp = jax.random.split(key)
    x = jax.random.normal(kx, (batch, input_size), jnp.float32)
    params = init_params(kp, input_size)

    out = jax.block_until_ready(train_nn_forward(x, params))
    assert out.shape == (batch, input_size)

    # Strict check vs a reference that mirrors the kernel arithmetic (bf16 matmuls).
    ws, bs = fold_bn(params)
    ref_bf16 = reference_forward_bf16(x, ws, bs)
    assert jnp.allclose(out, ref_bf16, atol=2e-3, rtol=2e-3), \
        "Pallas output mismatch vs bf16-matched reference"

    # Looser semantic check vs the original f32 module forward (bf16 rounding only).
    ref_f32 = reference_forward_f32(x, params)
    assert jnp.allclose(out, ref_f32, atol=5e-2, rtol=5e-2), \
        "Pallas output mismatch vs f32 module reference"

    print("KERNEL_OK")
</pallas_src>

<mosaic_0001>
module attributes {stable_mosaic.version = 11 : i64} {
  func.func @mlp_kernel(%arg0: i32, %arg1: memref<8x32xf32, #tpu.memory_space<vmem>>, %arg2: memref<32x128xbf16, #tpu.memory_space<vmem>>, %arg3: memref<1x128xf32, #tpu.memory_space<vmem>>, %arg4: memref<128x256xbf16, #tpu.memory_space<vmem>>, %arg5: memref<1x256xf32, #tpu.memory_space<vmem>>, %arg6: memref<256x128xbf16, #tpu.memory_space<vmem>>, %arg7: memref<1x128xf32, #tpu.memory_space<vmem>>, %arg8: memref<128x128xbf16, #tpu.memory_space<vmem>>, %arg9: memref<1x128xf32, #tpu.memory_space<vmem>>, %arg10: memref<128x32xbf16, #tpu.memory_space<vmem>>, %arg11: memref<1x32xf32, #tpu.memory_space<vmem>>, %arg12: memref<8x32xf32, #tpu.memory_space<vmem>>) attributes {dimension_semantics = [#tpu.dimension_semantics<parallel>], iteration_bounds = array<i64: 1>, scalar_prefetch = 0 : i64, scratch_operands = 0 : i64, tpu.core_type = #tpu.core_type<tc>, window_params = [{transform_indices = @transform_0, window_bounds = array<i64: 8, 32>}, {pipeline_mode = #tpu.pipeline_mode<synchronous>, transform_indices = @transform_1, window_bounds = array<i64: 32, 128>}, {pipeline_mode = #tpu.pipeline_mode<synchronous>, transform_indices = @transform_2, window_bounds = array<i64: 1, 128>}, {pipeline_mode = #tpu.pipeline_mode<synchronous>, transform_indices = @transform_3, window_bounds = array<i64: 128, 256>}, {pipeline_mode = #tpu.pipeline_mode<synchronous>, transform_indices = @transform_4, window_bounds = array<i64: 1, 256>}, {pipeline_mode = #tpu.pipeline_mode<synchronous>, transform_indices = @transform_5, window_bounds = array<i64: 256, 128>}, {pipeline_mode = #tpu.pipeline_mode<synchronous>, transform_indices = @transform_6, window_bounds = array<i64: 1, 128>}, {pipeline_mode = #tpu.pipeline_mode<synchronous>, transform_indices = @transform_7, window_bounds = array<i64: 128, 128>}, {pipeline_mode = #tpu.pipeline_mode<synchronous>, transform_indices = @transform_8, window_bounds = array<i64: 1, 128>}, {pipeline_mode = #tpu.pipeline_mode<synchronous>, transform_indices = @transform_9, window_bounds = array<i64: 128, 32>}, {pipeline_mode = #tpu.pipeline_mode<synchronous>, transform_indices = @transform_10, window_bounds = array<i64: 1, 32>}, {transform_indices = @transform_11, window_bounds = array<i64: 8, 32>}]} {
    %c0 = arith.constant 0 : index
    %c0_0 = arith.constant 0 : index
    %0 = vector.load %arg1[%c0, %c0_0] : memref<8x32xf32, #tpu.memory_space<vmem>>, vector<8x32xf32>
    %1 = arith.truncf %0 : vector<8x32xf32> to vector<8x32xbf16>
    %c0_1 = arith.constant 0 : index
    %c0_2 = arith.constant 0 : index
    %2 = vector.load %arg2[%c0_1, %c0_2] : memref<32x128xbf16, #tpu.memory_space<vmem>>, vector<32x128xbf16>
    %cst = arith.constant dense<0.000000e+00> : vector<8x128xf32>
    %3 = tpu.matmul %1, %2, %cst {dimension_numbers = #tpu.dot_dimension_numbers<[1], [0], [0], [1], [0, 0, 1, 1], [], []>} : vector<8x32xbf16>, vector<32x128xbf16>, vector<8x128xf32> -> vector<8x128xf32>
    %c0_3 = arith.constant 0 : index
    %c0_4 = arith.constant 0 : index
    %4 = vector.load %arg3[%c0_3, %c0_4] : memref<1x128xf32, #tpu.memory_space<vmem>>, vector<1x128xf32>
    %5 = vector.broadcast %4 : vector<1x128xf32> to vector<8x128xf32>
    %6 = arith.addf %3, %5 : vector<8x128xf32>
    %cst_5 = arith.constant 0.000000e+00 : f32
    %7 = vector.broadcast %cst_5 : f32 to vector<8x128xf32>
    %8 = arith.maximumf %6, %7 : vector<8x128xf32>
    %9 = arith.truncf %8 : vector<8x128xf32> to vector<8x128xbf16>
    %c0_6 = arith.constant 0 : index
    %c0_7 = arith.constant 0 : index
    %10 = vector.load %arg4[%c0_6, %c0_7] : memref<128x256xbf16, #tpu.memory_space<vmem>>, vector<128x256xbf16>
    %cst_8 = arith.constant dense<0.000000e+00> : vector<8x256xf32>
    %11 = tpu.matmul %9, %10, %cst_8 {dimension_numbers = #tpu.dot_dimension_numbers<[1], [0], [0], [1], [0, 0, 1, 1], [], []>} : vector<8x128xbf16>, vector<128x256xbf16>, vector<8x256xf32> -> vector<8x256xf32>
    %c0_9 = arith.constant 0 : index
    %c0_10 = arith.constant 0 : index
    %12 = vector.load %arg5[%c0_9, %c0_10] : memref<1x256xf32, #tpu.memory_space<vmem>>, vector<1x256xf32>
    %13 = vector.broadcast %12 : vector<1x256xf32> to vector<8x256xf32>
    %14 = arith.addf %11, %13 : vector<8x256xf32>
    %cst_11 = arith.constant 0.000000e+00 : f32
    %15 = vector.broadcast %cst_11 : f32 to vector<8x256xf32>
    %16 = arith.maximumf %14, %15 : vector<8x256xf32>
    %17 = arith.truncf %16 : vector<8x256xf32> to vector<8x256xbf16>
    %c0_12 = arith.constant 0 : index
    %c0_13 = arith.constant 0 : index
    %18 = vector.load %arg6[%c0_12, %c0_13] : memref<256x128xbf16, #tpu.memory_space<vmem>>, vector<256x128xbf16>
    %cst_14 = arith.constant dense<0.000000e+00> : vector<8x128xf32>
    %19 = tpu.matmul %17, %18, %cst_14 {dimension_numbers = #tpu.dot_dimension_numbers<[1], [0], [0], [1], [0, 0, 1, 1], [], []>} : vector<8x256xbf16>, vector<256x128xbf16>, vector<8x128xf32> -> vector<8x128xf32>
    %c0_15 = arith.constant 0 : index
    %c0_16 = arith.constant 0 : index
    %20 = vector.load %arg7[%c0_15, %c0_16] : memref<1x128xf32, #tpu.memory_space<vmem>>, vector<1x128xf32>
    %21 = vector.broadcast %20 : vector<1x128xf32> to vector<8x128xf32>
    %22 = arith.addf %19, %21 : vector<8x128xf32>
    %cst_17 = arith.constant 0.000000e+00 : f32
    %23 = vector.broadcast %cst_17 : f32 to vector<8x128xf32>
    %24 = arith.maximumf %22, %23 : vector<8x128xf32>
    %25 = arith.truncf %24 : vector<8x128xf32> to vector<8x128xbf16>
    %c0_18 = arith.constant 0 : index
    %c0_19 = arith.constant 0 : index
    %26 = vector.load %arg8[%c0_18, %c0_19] : memref<128x128xbf16, #tpu.memory_space<vmem>>, vector<128x128xbf16>
    %cst_20 = arith.constant dense<0.000000e+00> : vector<8x128xf32>
    %27 = tpu.matmul %25, %26, %cst_20 {dimension_numbers = #tpu.dot_dimension_numbers<[1], [0], [0], [1], [0, 0, 1, 1], [], []>} : vector<8x128xbf16>, vector<128x128xbf16>, vector<8x128xf32> -> vector<8x128xf32>
    %c0_21 = arith.constant 0 : index
    %c0_22 = arith.constant 0 : index
    %28 = vector.load %arg9[%c0_21, %c0_22] : memref<1x128xf32, #tpu.memory_space<vmem>>, vector<1x128xf32>
    %29 = vector.broadcast %28 : vector<1x128xf32> to vector<8x128xf32>
    %30 = arith.addf %27, %29 : vector<8x128xf32>
    %cst_23 = arith.constant 0.000000e+00 : f32
    %31 = vector.broadcast %cst_23 : f32 to vector<8x128xf32>
    %32 = arith.maximumf %30, %31 : vector<8x128xf32>
    %33 = arith.truncf %32 : vector<8x128xf32> to vector<8x128xbf16>
    %c0_24 = arith.constant 0 : index
    %c0_25 = arith.constant 0 : index
    %34 = vector.load %arg10[%c0_24, %c0_25] : memref<128x32xbf16, #tpu.memory_space<vmem>>, vector<128x32xbf16>
    %cst_26 = arith.constant dense<0.000000e+00> : vector<8x32xf32>
    %35 = tpu.matmul %33, %34, %cst_26 {dimension_numbers = #tpu.dot_dimension_numbers<[1], [0], [0], [1], [0, 0, 1, 1], [], []>} : vector<8x128xbf16>, vector<128x32xbf16>, vector<8x32xf32> -> vector<8x32xf32>
    %c0_27 = arith.constant 0 : index
    %c0_28 = arith.constant 0 : index
    %36 = vector.load %arg11[%c0_27, %c0_28] : memref<1x32xf32, #tpu.memory_space<vmem>>, vector<1x32xf32>
    %37 = vector.broadcast %36 : vector<1x32xf32> to vector<8x32xf32>
    %38 = arith.addf %35, %37 : vector<8x32xf32>
    %39 = arith.negf %38 : vector<8x32xf32>
    %40 = math.exp %39 : vector<8x32xf32>
    %cst_29 = arith.constant 1.000000e+00 : f32
    %41 = vector.broadcast %cst_29 : f32 to vector<8x32xf32>
    %42 = arith.addf %41, %40 : vector<8x32xf32>
    %43 = arith.divf %41, %42 : vector<8x32xf32>
    %c0_30 = arith.constant 0 : index
    %c0_31 = arith.constant 0 : index
    %44 = vector.load %arg12[%c0_30, %c0_31] : memref<8x32xf32, #tpu.memory_space<vmem>>, vector<8x32xf32>
    tpu.vector_store %arg12[%c0_30, %c0_31], %43 {strides = array<i32>} : memref<8x32xf32, #tpu.memory_space<vmem>>, vector<8x32xf32>,
    return
  }
  func.func @transform_0(%arg0: i32) -> (i32, i32) {
    %c0_i32 = arith.constant 0 : i32
    %c0_i32_0 = arith.constant 0 : i32
    return %arg0, %c0_i32 : i32, i32
  }
  func.func @transform_1(%arg0: i32) -> (i32, i32) {
    %c0_i32 = arith.constant 0 : i32
    %c0_i32_0 = arith.constant 0 : i32
    %c0_i32_1 = arith.constant 0 : i32
    return %c0_i32, %c0_i32_0 : i32, i32
  }
  func.func @transform_2(%arg0: i32) -> (i32, i32) {
    %c0_i32 = arith.constant 0 : i32
    %c0_i32_0 = arith.constant 0 : i32
    %c0_i32_1 = arith.constant 0 : i32
    return %c0_i32, %c0_i32_0 : i32, i32
  }
  func.func @transform_3(%arg0: i32) -> (i32, i32) {
    %c0_i32 = arith.constant 0 : i32
    %c0_i32_0 = arith.constant 0 : i32
    %c0_i32_1 = arith.constant 0 : i32
    return %c0_i32, %c0_i32_0 : i32, i32
  }
  func.func @transform_4(%arg0: i32) -> (i32, i32) {
    %c0_i32 = arith.constant 0 : i32
    %c0_i32_0 = arith.constant 0 : i32
    %c0_i32_1 = arith.constant 0 : i32
    return %c0_i32, %c0_i32_0 : i32, i32
  }
  func.func @transform_5(%arg0: i32) -> (i32, i32) {
    %c0_i32 = arith.constant 0 : i32
    %c0_i32_0 = arith.constant 0 : i32
    %c0_i32_1 = arith.constant 0 : i32
    return %c0_i32, %c0_i32_0 : i32, i32
  }
  func.func @transform_6(%arg0: i32) -> (i32, i32) {
    %c0_i32 = arith.constant 0 : i32
    %c0_i32_0 = arith.constant 0 : i32
    %c0_i32_1 = arith.constant 0 : i32
    return %c0_i32, %c0_i32_0 : i32, i32
  }
  func.func @transform_7(%arg0: i32) -> (i32, i32) {
    %c0_i32 = arith.constant 0 : i32
    %c0_i32_0 = arith.constant 0 : i32
    %c0_i32_1 = arith.constant 0 : i32
    return %c0_i32, %c0_i32_0 : i32, i32
  }
  func.func @transform_8(%arg0: i32) -> (i32, i32) {
    %c0_i32 = arith.constant 0 : i32
    %c0_i32_0 = arith.constant 0 : i32
    %c0_i32_1 = arith.constant 0 : i32
    return %c0_i32, %c0_i32_0 : i32, i32
  }
  func.func @transform_9(%arg0: i32) -> (i32, i32) {
    %c0_i32 = arith.constant 0 : i32
    %c0_i32_0 = arith.constant 0 : i32
    %c0_i32_1 = arith.constant 0 : i32
    return %c0_i32, %c0_i32_0 : i32, i32
  }
  func.func @transform_10(%arg0: i32) -> (i32, i32) {
    %c0_i32 = arith.constant 0 : i32
    %c0_i32_0 = arith.constant 0 : i32
    %c0_i32_1 = arith.constant 0 : i32
    return %c0_i32, %c0_i32_0 : i32, i32
  }
  func.func @transform_11(%arg0: i32) -> (i32, i32) {
    %c0_i32 = arith.constant 0 : i32
    %c0_i32_0 = arith.constant 0 : i32
    return %arg0, %c0_i32 : i32, i32
  }
}

</mosaic_0001>

<llo_original>
// kernel: tpu_custom_call.1
$region0: #{tpu_custom_call.1}
  #allocation0 [shape = 'u32[]', space=smem, size = 0x4, offset = 0x4, fixed_abs, tag = 'smem constant byte address 0x4 - core index']
  #allocation1 [shape = 'u32[144,128]{1,0:T(1,128)}', space=vmem, size = 0x12000, scoped, tag = 'internal scratch']
  %s0 = inlined_call_operand.vmem [shape: f32[8,32], index: 0, kind: input, shape index: {}]
  %s1 = inlined_call_operand.vmem [shape: bf16[32,128], index: 1, kind: input, shape index: {}]
  %s2 = inlined_call_operand.vmem [shape: f32[1,128], index: 2, kind: input, shape index: {}]
  %s3 = inlined_call_operand.hbm [shape: bf16[128,256], index: 3, kind: input, shape index: {}]
  %s4 = inlined_call_operand.vmem [shape: f32[1,256], index: 4, kind: input, shape index: {}]
  %s5 = inlined_call_operand.hbm [shape: bf16[256,128], index: 5, kind: input, shape index: {}]
  %s6 = inlined_call_operand.vmem [shape: f32[1,128], index: 6, kind: input, shape index: {}]
  %s7 = inlined_call_operand.vmem [shape: bf16[128,128], index: 7, kind: input, shape index: {}]
  %s8 = inlined_call_operand.vmem [shape: f32[1,128], index: 8, kind: input, shape index: {}]
  %s9 = inlined_call_operand.vmem [shape: bf16[128,32], index: 9, kind: input, shape index: {}]
  %s10 = inlined_call_operand.vmem [shape: f32[1,32], index: 10, kind: input, shape index: {}]
  %s11 = inlined_call_operand.hbm [shape: f32[8,32], index: 11, kind: output, shape index: {}]
  %s12 = sld [smem:[#allocation0]]
  $region62: #{tpu_custom_call.1} parent=0
    _
  %s14 = ssub.s32 1, %s12
  %s15 = scalar_select 0, %s14, %s12
  $region1: #{tpu_custom_call.1} parent=0
    #allocation2 [shape = 'u8[65536]{0}', space=vmem, size = 0x10000, scoped, tag = 'input window, operand 3, single buffered']
    #allocation3 [shape = 's32[1]{0}', space=sflag, size = 0x4, scoped, tag = 'scoped memory for tpu_custom_call.1']
    #allocation4 [shape = 's32[1]{0}', space=sflag, size = 0x4, scoped, tag = 'scoped memory for tpu_custom_call.1']
    #allocation5 [shape = 'u8[65536]{0}', space=vmem, size = 0x10000, scoped, tag = 'input window, operand 5, single buffered']
    #allocation6 [shape = 's32[1]{0}', space=sflag, size = 0x4, scoped, tag = 'scoped memory for tpu_custom_call.1']
    #allocation7 [shape = 'u8[4096]{0}', space=vmem, size = 0x1000, scoped, tag = 'output window, operand 0, single buffered']
    %16 = vsyncpa [#allocation3], 0
    %17 = vsyncpa [#allocation6], 0
    %18 = vsyncpa [#allocation4], 0
    // Predicated region
    $region2: #{tpu_custom_call.1} parent=1 // pred_check
      _
    $region3: #{tpu_custom_call.1} parent=1 // pred_check_branch
      %20 = sbr.rel (0) target = $region5
    $region4: #{tpu_custom_call.1} parent=1 // pred_region
      _
    $region5: #{tpu_custom_call.1} parent=1 // pred_fallthru
      _
    // Predicated region
    $region6: #{tpu_custom_call.1} parent=1 // pred_check
      _
    $region7: #{tpu_custom_call.1} parent=1 // pred_check_branch
      %22 = sbr.rel (0) target = $region9
    $region8: #{tpu_custom_call.1} parent=1 // pred_region
      _
    $region9: #{tpu_custom_call.1} parent=1 // pred_fallthru
      _
    // Predicated region
    $region10: #{tpu_custom_call.1} parent=1 // pred_check
      _
    $region11: #{tpu_custom_call.1} parent=1 // pred_check_branch
      %24 = sbr.rel (0) target = $region13
    $region12: #{tpu_custom_call.1} parent=1 // pred_region
      _
    $region13: #{tpu_custom_call.1} parent=1 // pred_fallthru
      _
    // Predicated region
    $region14: #{tpu_custom_call.1} parent=1 // pred_check
      _
    $region15: #{tpu_custom_call.1} parent=1 // pred_check_branch
      %26 = sbr.rel (0) target = $region17
    $region16: #{tpu_custom_call.1} parent=1 // pred_region
      %s28 = ssub.s32 2048, 2048
      %29 = vsyncadd [#allocation3], %s28
      %s30 = sshll.u32 [#allocation2], 4
      %s31 = int_to_ptr.vmem [resolvable:$true] %s30
      %36 = dma.hbm_to_vmem [thread:$0]  %s3, 2048, %s31, [#allocation3], 128, 128, 8
    $region17: #{tpu_custom_call.1} parent=1 // pred_fallthru
      _
    // Predicated region
    $region18: #{tpu_custom_call.1} parent=1 // pred_check
      _
    $region19: #{tpu_custom_call.1} parent=1 // pred_check_branch
      %38 = sbr.rel (0) target = $region21
    $region20: #{tpu_custom_call.1} parent=1 // pred_region
      _
    $region21: #{tpu_custom_call.1} parent=1 // pred_fallthru
      _
    // Predicated region
    $region22: #{tpu_custom_call.1} parent=1 // pred_check
      _
    $region23: #{tpu_custom_call.1} parent=1 // pred_check_branch
      %40 = sbr.rel (0) target = $region25
    $region24: #{tpu_custom_call.1} parent=1 // pred_region
      %s42 = ssub.s32 2048, 2048
      %43 = vsyncadd [#allocation6], %s42
      %s44 = sshll.u32 [#allocation5], 4
      %s45 = int_to_ptr.vmem [resolvable:$true] %s44
      %50 = dma.hbm_to_vmem [thread:$0]  %s5, 2048, %s45, [#allocation6], 64, 64, 4
    $region25: #{tpu_custom_call.1} parent=1 // pred_fallthru
      _
    // Predicated region
    $region26: #{tpu_custom_call.1} parent=1 // pred_check
      _
    $region27: #{tpu_custom_call.1} parent=1 // pred_check_branch
      %52 = sbr.rel (0) target = $region29
    $region28: #{tpu_custom_call.1} parent=1 // pred_region
      _
    $region29: #{tpu_custom_call.1} parent=1 // pred_fallthru
      _
    // Predicated region
    $region30: #{tpu_custom_call.1} parent=1 // pred_check
      _
    $region31: #{tpu_custom_call.1} parent=1 // pred_check_branch
      %54 = sbr.rel (0) target = $region33
    $region32: #{tpu_custom_call.1} parent=1 // pred_region
      _
    $region33: #{tpu_custom_call.1} parent=1 // pred_fallthru
      _
    // Predicated region
    $region34: #{tpu_custom_call.1} parent=1 // pred_check
      _
    $region35: #{tpu_custom_call.1} parent=1 // pred_check_branch
      %56 = sbr.rel (0) target = $region37
    $region36: #{tpu_custom_call.1} parent=1 // pred_region
      _
    $region37: #{tpu_custom_call.1} parent=1 // pred_fallthru
      _
    // Predicated region
    $region38: #{tpu_custom_call.1} parent=1 // pred_check
      _
    $region39: #{tpu_custom_call.1} parent=1 // pred_check_branch
      %58 = sbr.rel (0) target = $region41
    $region40: #{tpu_custom_call.1} parent=1 // pred_region
      _
    $region41: #{tpu_custom_call.1} parent=1 // pred_fallthru
      _
    // Predicated region
    $region42: #{tpu_custom_call.1} parent=1 // pred_check
      _
    $region43: #{tpu_custom_call.1} parent=1 // pred_check_branch
      %60 = sbr.rel (0) target = $region45
    $region44: #{tpu_custom_call.1} parent=1 // pred_region
      _
    $region45: #{tpu_custom_call.1} parent=1 // pred_fallthru
      _
    // Predicated region
    $region46: #{tpu_custom_call.1} parent=1 // pred_check
      _
    $region47: #{tpu_custom_call.1} parent=1 // pred_check_branch
      %62 = sbr.rel (0) target = $region49
    $region48: #{tpu_custom_call.1} parent=1 // pred_region
      %63 = dma.done [#allocation3], 2048
    $region49: #{tpu_custom_call.1} parent=1 // pred_fallthru
      _
    // Predicated region
    $region50: #{tpu_custom_call.1} parent=1 // pred_check
      _
    $region51: #{tpu_custom_call.1} parent=1 // pred_check_branch
      %65 = sbr.rel (0) target = $region53
    $region52: #{tpu_custom_call.1} parent=1 // pred_region
      %66 = dma.done [#allocation6], 2048
    $region53: #{tpu_custom_call.1} parent=1 // pred_fallthru
      _
    %v68 = vld [vmem:[%s0] sm:$0xff]
    %v69 = vpack.c.bf16 %v68, %v68
    %v70 = vld [vmem:[%s1] sm:$0xf]
    %v71 = vld [vmem:[%s1 + $0x4] sm:$0xf]
    %v72 = vld [vmem:[%s1 + $0x8] sm:$0xf]
    %v73 = vld [vmem:[%s1 + $0xc] sm:$0xf]
    %v74 = vld [vmem:[%s2] sm:$0x1]
    %v76 = vlaneseq
    %v77 = vshrl.u32 %v76, 7
    %v78 = vsub.s32 0, %v77
    %v79 = vrot.slane %v74, %v78
    %v85 = vunpack.c.l.b16 %v70
    %v86 = vunpack.c.l.b16 %v71
    %v87 = vunpack.c.l.b16 %v72
    %v88 = vunpack.c.l.b16 %v73
    %v89 = vpack.c.b16 %v86, %v85
    %v90 = vpack.c.b16 %v88, %v87
    %vm93 = vcmask 261120
    %v95 = vsel %vm93, %v69, 0
    %97 = vmatprep.subr.bf16.mxu0 0
    %98 = vmatpush1.bf16.msra.mxu0 %v89
    %99 = vmatprep.subr.bf16.mxu0 0
    %100 = vmatpush1.bf16.msra.mxu0 %v90
    %101 = vmatprep.subr.bf16.mxu0 0
    %102 = vmatpush1.bf16.msra.mxu0 0
    %103 = vmatprep.subr.bf16.mxu0 0
    %104 = vmatpush1.bf16.msra.mxu0 0
    %105 = vmatprep.subr.bf16.mxu0 0
    %106 = vmatpush1.bf16.msra.mxu0 0
    %107 = vmatprep.subr.bf16.mxu0 0
    %108 = vmatpush1.bf16.msra.mxu0 0
    %109 = vmatprep.subr.bf16.mxu0 0
    %110 = vmatpush1.bf16.msra.mxu0 0
    %111 = vmatprep.subr.bf16.mxu0 0
    %112 = vmatpush1.bf16.msra.mxu0 0
    %113 = vmatprep.subr.bf16.mxu0 0
    %114 = vmatpush1.bf16.msra.mxu0 0
    %115 = vmatprep.subr.bf16.mxu0 0
    %116 = vmatpush1.bf16.msra.mxu0 0
    %117 = vmatprep.subr.bf16.mxu0 0
    %118 = vmatpush1.bf16.msra.mxu0 0
    %119 = vmatprep.subr.bf16.mxu0 0
    %120 = vmatpush1.bf16.msra.mxu0 0
    %121 = vmatprep.subr.bf16.mxu0 0
    %122 = vmatpush1.bf16.msra.mxu0 0
    %123 = vmatprep.subr.bf16.mxu0 0
    %124 = vmatpush1.bf16.msra.mxu0 0
    %125 = vmatprep.subr.bf16.mxu0 0
    %126 = vmatpush1.bf16.msra.mxu0 0
    %127 = vmatprep.subr.bf16.mxu0 0
    %128 = vmatpush1.bf16.msra.mxu0 0
    %129 = vmatprep.mubr.bf16.mxu0 0
    %130 = vmatmul.mubr.bf16.gmra.mrb[0].mxu0 %v95
    %v131 = vpop.f32.mrb[0].mxu0
    %v132 = vadd.f32 %v79, %v131
    %v133 = vpop.f32.mrb[0].mxu0
    %v134 = vpop.f32.mrb[0].mxu0
    %v135 = vpop.f32.mrb[0].mxu0
    %136 = vdwg.mxu0
    %v137 = vmax.f32 %v132, 0.0
    %v138 = vpack.c.bf16 %v137, %v137
    %v139 = vld [vmem:[#allocation2] sm:$0xff]
    %v140 = vld [vmem:[#allocation2 + $0x8] sm:$0xff]
    %v141 = vld [vmem:[#allocation2 + $0x10] sm:$0xff]
    %v142 = vld [vmem:[#allocation2 + $0x18] sm:$0xff]
    %v143 = vld [vmem:[#allocation2 + $0x20] sm:$0xff]
    %v144 = vld [vmem:[#allocation2 + $0x28] sm:$0xff]
    %v145 = vld [vmem:[#allocation2 + $0x30] sm:$0xff]
    %v146 = vld [vmem:[#allocation2 + $0x38] sm:$0xff]
    %v147 = vld [vmem:[#allocation2 + $0x40] sm:$0xff]
    %v148 = vld [vmem:[#allocation2 + $0x48] sm:$0xff]
    %v149 = vld [vmem:[#allocation2 + $0x50] sm:$0xff]
    %v150 = vld [vmem:[#allocation2 + $0x58] sm:$0xff]
    %v151 = vld [vmem:[#allocation2 + $0x60] sm:$0xff]
    %v152 = vld [vmem:[#allocation2 + $0x68] sm:$0xff]
    %v153 = vld [vmem:[#allocation2 + $0x70] sm:$0xff]
    %v154 = vld [vmem:[#allocation2 + $0x78] sm:$0xff]
    %v155 = vld [vmem:[%s4] sm:$0x3]
    %v157 = vlaneseq
    %v158 = vshrl.u32 %v157, 7
    %v159 = vsub.s32 0, %v158
    %v160 = vrot.slane %v155, %v159
    %v161 = vlaneseq
    %v162 = vshrl.u32 %v161, 7
    %v163 = vsub.s32 1, %v162
    %v164 = vrot.slane %v155, %v163
    %v183 = vunpack.c.l.b16 %v139
    %v184 = vunpack.c.h.b16 %v139
    %v185 = vunpack.c.l.b16 %v140
    %v186 = vunpack.c.h.b16 %v140
    %v187 = vunpack.c.l.b16 %v141
    %v188 = vunpack.c.h.b16 %v141
    %v189 = vunpack.c.l.b16 %v142
    %v190 = vunpack.c.h.b16 %v142
    %v191 = vunpack.c.l.b16 %v143
    %v192 = vunpack.c.h.b16 %v143
    %v193 = vunpack.c.l.b16 %v144
    %v194 = vunpack.c.h.b16 %v144
    %v195 = vunpack.c.l.b16 %v145
    %v196 = vunpack.c.h.b16 %v145
    %v197 = vunpack.c.l.b16 %v146
    %v198 = vunpack.c.h.b16 %v146
    %v199 = vunpack.c.l.b16 %v147
    %v200 = vunpack.c.h.b16 %v147
    %v201 = vunpack.c.l.b16 %v148
    %v202 = vunpack.c.h.b16 %v148
    %v203 = vunpack.c.l.b16 %v149
    %v204 = vunpack.c.h.b16 %v149
    %v205 = vunpack.c.l.b16 %v150
    %v206 = vunpack.c.h.b16 %v150
    %v207 = vunpack.c.l.b16 %v151
    %v208 = vunpack.c.h.b16 %v151
    %v209 = vunpack.c.l.b16 %v152
    %v210 = vunpack.c.h.b16 %v152
    %v211 = vunpack.c.l.b16 %v153
    %v212 = vunpack.c.h.b16 %v153
    %v213 = vunpack.c.l.b16 %v154
    %v214 = vunpack.c.h.b16 %v154
    %v215 = vpack.c.b16 %v185, %v183
    %v216 = vpack.c.b16 %v186, %v184
    %v217 = vpack.c.b16 %v189, %v187
    %v218 = vpack.c.b16 %v190, %v188
    %v219 = vpack.c.b16 %v193, %v191
    %v220 = vpack.c.b16 %v194, %v192
    %v221 = vpack.c.b16 %v197, %v195
    %v222 = vpack.c.b16 %v198, %v196
    %v223 = vpack.c.b16 %v201, %v199
    %v224 = vpack.c.b16 %v202, %v200
    %v225 = vpack.c.b16 %v205, %v203
    %v226 = vpack.c.b16 %v206, %v204
    %v227 = vpack.c.b16 %v209, %v207
    %v228 = vpack.c.b16 %v210, %v208
    %v229 = vpack.c.b16 %v213, %v211
    %v230 = vpack.c.b16 %v214, %v212
    %247 = vmatprep.subr.bf16.mxu0 %v216
    %248 = vmatpush1.bf16.msra.mxu0 %v215
    %249 = vmatprep.subr.bf16.mxu0 %v218
    %250 = vmatpush1.bf16.msra.mxu0 %v217
    %251 = vmatprep.subr.bf16.mxu0 %v220
    %252 = vmatpush1.bf16.msra.mxu0 %v219
    %253 = vmatprep.subr.bf16.mxu0 %v222
    %254 = vmatpush1.bf16.msra.mxu0 %v221
    %255 = vmatprep.subr.bf16.mxu0 %v224
    %256 = vmatpush1.bf16.msra.mxu0 %v223
    %257 = vmatprep.subr.bf16.mxu0 %v226
    %258 = vmatpush1.bf16.msra.mxu0 %v225
    %259 = vmatprep.subr.bf16.mxu0 %v228
    %260 = vmatpush1.bf16.msra.mxu0 %v227
    %261 = vmatprep.subr.bf16.mxu0 %v230
    %262 = vmatpush1.bf16.msra.mxu0 %v229
    %263 = vmatprep.subr.bf16.mxu0 0
    %264 = vmatpush1.bf16.msra.mxu0 0
    %265 = vmatprep.subr.bf16.mxu0 0
    %266 = vmatpush1.bf16.msra.mxu0 0
    %267 = vmatprep.subr.bf16.mxu0 0
    %268 = vmatpush1.bf16.msra.mxu0 0
    %269 = vmatprep.subr.bf16.mxu0 0
    %270 = vmatpush1.bf16.msra.mxu0 0
    %271 = vmatprep.subr.bf16.mxu0 0
    %272 = vmatpush1.bf16.msra.mxu0 0
    %273 = vmatprep.subr.bf16.mxu0 0
    %274 = vmatpush1.bf16.msra.mxu0 0
    %275 = vmatprep.subr.bf16.mxu0 0
    %276 = vmatpush1.bf16.msra.mxu0 0
    %277 = vmatprep.subr.bf16.mxu0 0
    %278 = vmatpush1.bf16.msra.mxu0 0
    %279 = vmatprep.mubr.bf16.mxu0 0
    %280 = vmatmul.mubr.bf16.gmra.mrb[0].mxu0 %v138
    %v281 = vpop.f32.mrb[0].mxu0
    %v282 = vadd.f32 %v160, %v281
    %v283 = vpop.f32.mrb[0].mxu0
    %v284 = vadd.f32 %v164, %v283
    %v285 = vpop.f32.mrb[0].mxu0
    %v286 = vpop.f32.mrb[0].mxu0
    %287 = vdwg.mxu0
    %v288 = vmax.f32 %v282, 0.0
    %v289 = vmax.f32 %v284, 0.0
    %v290 = vpack.c.bf16 %v288, %v288
    %v291 = vpack.c.bf16 %v289, %v289
    %v292 = vld [vmem:[#allocation5] sm:$0xf]
    %v293 = vld [vmem:[#allocation5 + $0x4] sm:$0xf]
    %v294 = vld [vmem:[#allocation5 + $0x8] sm:$0xf]
    %v295 = vld [vmem:[#allocation5 + $0xc] sm:$0xf]
    %v296 = vld [vmem:[#allocation5 + $0x10] sm:$0xf]
    %v297 = vld [vmem:[#allocation5 + $0x14] sm:$0xf]
    %v298 = vld [vmem:[#allocation5 + $0x18] sm:$0xf]
    %v299 = vld [vmem:[#allocation5 + $0x1c] sm:$0xf]
    %v300 = vld [vmem:[#allocation5 + $0x20] sm:$0xf]
    %v301 = vld [vmem:[#allocation5 + $0x24] sm:$0xf]
    %v302 = vld [vmem:[#allocation5 + $0x28] sm:$0xf]
    %v303 = vld [vmem:[#allocation5 + $0x2c] sm:$0xf]
    %v304 = vld [vmem:[#allocation5 + $0x30] sm:$0xf]
    %v305 = vld [vmem:[#allocation5 + $0x34] sm:$0xf]
    %v306 = vld [vmem:[#allocation5 + $0x38] sm:$0xf]
    %v307 = vld [vmem:[#allocation5 + $0x3c] sm:$0xf]
    %v308 = vld [vmem:[#allocation5 + $0x40] sm:$0xf]
    %v309 = vld [vmem:[#allocation5 + $0x44] sm:$0xf]
    %v310 = vld [vmem:[#allocation5 + $0x48] sm:$0xf]
    %v311 = vld [vmem:[#allocation5 + $0x4c] sm:$0xf]
    %v312 = vld [vmem:[#allocation5 + $0x50] sm:$0xf]
    %v313 = vld [vmem:[#allocation5 + $0x54] sm:$0xf]
    %v314 = vld [vmem:[#allocation5 + $0x58] sm:$0xf]
    %v315 = vld [vmem:[#allocation5 + $0x5c] sm:$0xf]
    %v316 = vld [vmem:[#allocation5 + $0x60] sm:$0xf]
    %v317 = vld [vmem:[#allocation5 + $0x64] sm:$0xf]
    %v318 = vld [vmem:[#allocation5 + $0x68] sm:$0xf]
    %v319 = vld [vmem:[#allocation5 + $0x6c] sm:$0xf]
    %v320 = vld [vmem:[#allocation5 + $0x70] sm:$0xf]
    %v321 = vld [vmem:[#allocation5 + $0x74] sm:$0xf]
    %v322 = vld [vmem:[#allocation5 + $0x78] sm:$0xf]
    %v323 = vld [vmem:[#allocation5 + $0x7c] sm:$0xf]
    %v324 = vld [vmem:[%s6] sm:$0x1]
    %v326 = vlaneseq
    %v327 = vshrl.u32 %v326, 7
    %v328 = vsub.s32 0, %v327
    %v329 = vrot.slane %v324, %v328
    %v363 = vunpack.c.l.b16 %v292
    %v364 = vunpack.c.l.b16 %v293
    %v365 = vunpack.c.l.b16 %v294
    %v366 = vunpack.c.l.b16 %v295
    %v367 = vunpack.c.l.b16 %v296
    %v368 = vunpack.c.l.b16 %v297
    %v369 = vunpack.c.l.b16 %v298
    %v370 = vunpack.c.l.b16 %v299
    %v371 = vunpack.c.l.b16 %v300
    %v372 = vunpack.c.l.b16 %v301
    %v373 = vunpack.c.l.b16 %v302
    %v374 = vunpack.c.l.b16 %v303
    %v375 = vunpack.c.l.b16 %v304
    %v376 = vunpack.c.l.b16 %v305
    %v377 = vunpack.c.l.b16 %v306
    %v378 = vunpack.c.l.b16 %v307
    %v379 = vunpack.c.l.b16 %v308
    %v380 = vunpack.c.l.b16 %v309
    %v381 = vunpack.c.l.b16 %v310
    %v382 = vunpack.c.l.b16 %v311
    %v383 = vunpack.c.l.b16 %v312
    %v384 = vunpack.c.l.b16 %v313
    %v385 = vunpack.c.l.b16 %v314
    %v386 = vunpack.c.l.b16 %v315
    %v387 = vunpack.c.l.b16 %v316
    %v388 = vunpack.c.l.b16 %v317
    %v389 = vunpack.c.l.b16 %v318
    %v390 = vunpack.c.l.b16 %v319
    %v391 = vunpack.c.l.b16 %v320
    %v392 = vunpack.c.l.b16 %v321
    %v393 = vunpack.c.l.b16 %v322
    %v394 = vunpack.c.l.b16 %v323
    %v395 = vpack.c.b16 %v364, %v363
    %v396 = vpack.c.b16 %v366, %v365
    %v397 = vpack.c.b16 %v368, %v367
    %v398 = vpack.c.b16 %v370, %v369
    %v399 = vpack.c.b16 %v372, %v371
    %v400 = vpack.c.b16 %v374, %v373
    %v401 = vpack.c.b16 %v376, %v375
    %v402 = vpack.c.b16 %v378, %v377
    %v403 = vpack.c.b16 %v380, %v379
    %v404 = vpack.c.b16 %v382, %v381
    %v405 = vpack.c.b16 %v384, %v383
    %v406 = vpack.c.b16 %v386, %v385
    %v407 = vpack.c.b16 %v388, %v387
    %v408 = vpack.c.b16 %v390, %v389
    %v409 = vpack.c.b16 %v392, %v391
    %v410 = vpack.c.b16 %v394, %v393
    %427 = vmatprep.subr.bf16.mxu0 0
    %428 = vmatpush1.bf16.msra.mxu0 %v395
    %429 = vmatprep.subr.bf16.mxu0 0
    %430 = vmatpush1.bf16.msra.mxu0 %v396
    %431 = vmatprep.subr.bf16.mxu0 0
    %432 = vmatpush1.bf16.msra.mxu0 %v397
    %433 = vmatprep.subr.bf16.mxu0 0
    %434 = vmatpush1.bf16.msra.mxu0 %v398
    %435 = vmatprep.subr.bf16.mxu0 0
    %436 = vmatpush1.bf16.msra.mxu0 %v399
    %437 = vmatprep.subr.bf16.mxu0 0
    %438 = vmatpush1.bf16.msra.mxu0 %v400
    %439 = vmatprep.subr.bf16.mxu0 0
    %440 = vmatpush1.bf16.msra.mxu0 %v401
    %441 = vmatprep.subr.bf16.mxu0 0
    %442 = vmatpush1.bf16.msra.mxu0 %v402
    %443 = vmatprep.subr.bf16.mxu0 0
    %444 = vmatpush1.bf16.msra.mxu0 %v403
    %445 = vmatprep.subr.bf16.mxu0 0
    %446 = vmatpush1.bf16.msra.mxu0 %v404
    %447 = vmatprep.subr.bf16.mxu0 0
    %448 = vmatpush1.bf16.msra.mxu0 %v405
    %449 = vmatprep.subr.bf16.mxu0 0
    %450 = vmatpush1.bf16.msra.mxu0 %v406
    %451 = vmatprep.subr.bf16.mxu0 0
    %452 = vmatpush1.bf16.msra.mxu0 %v407
    %453 = vmatprep.subr.bf16.mxu0 0
    %454 = vmatpush1.bf16.msra.mxu0 %v408
    %455 = vmatprep.subr.bf16.mxu0 0
    %456 = vmatpush1.bf16.msra.mxu0 %v409
    %457 = vmatprep.subr.bf16.mxu0 0
    %458 = vmatpush1.bf16.msra.mxu0 %v410
    %459 = vmatprep.mubr.bf16.mxu0 %v291
    %460 = vmatmul.mubr.bf16.gmra.mrb[0].mxu0 %v290
    %v461 = vpop.f32.mrb[0].mxu0
    %v462 = vadd.f32 %v329, %v461
    %v463 = vpop.f32.mrb[0].mxu0
    %v464 = vpop.f32.mrb[0].mxu0
    %v465 = vpop.f32.mrb[0].mxu0
    %466 = vdwg.mxu0
    %v467 = vmax.f32 %v462, 0.0
    %v468 = vpack.c.bf16 %v467, %v467
    %v469 = vld [vmem:[%s7] sm:$0xf]
    %v470 = vld [vmem:[%s7 + $0x4] sm:$0xf]
    %v471 = vld [vmem:[%s7 + $0x8] sm:$0xf]
    %v472 = vld [vmem:[%s7 + $0xc] sm:$0xf]
    %v473 = vld [vmem:[%s7 + $0x10] sm:$0xf]
    %v474 = vld [vmem:[%s7 + $0x14] sm:$0xf]
    %v475 = vld [vmem:[%s7 + $0x18] sm:$0xf]
    %v476 = vld [vmem:[%s7 + $0x1c] sm:$0xf]
    %v477 = vld [vmem:[%s7 + $0x20] sm:$0xf]
    %v478 = vld [vmem:[%s7 + $0x24] sm:$0xf]
    %v479 = vld [vmem:[%s7 + $0x28] sm:$0xf]
    %v480 = vld [vmem:[%s7 + $0x2c] sm:$0xf]
    %v481 = vld [vmem:[%s7 + $0x30] sm:$0xf]
    %v482 = vld [vmem:[%s7 + $0x34] sm:$0xf]
    %v483 = vld [vmem:[%s7 + $0x38] sm:$0xf]
    %v484 = vld [vmem:[%s7 + $0x3c] sm:$0xf]
    %v485 = vld [vmem:[%s8] sm:$0x1]
    %v487 = vlaneseq
    %v488 = vshrl.u32 %v487, 7
    %v489 = vsub.s32 0, %v488
    %v490 = vrot.slane %v485, %v489
    %v508 = vunpack.c.l.b16 %v469
    %v509 = vunpack.c.l.b16 %v470
    %v510 = vunpack.c.l.b16 %v471
    %v511 = vunpack.c.l.b16 %v472
    %v512 = vunpack.c.l.b16 %v473
    %v513 = vunpack.c.l.b16 %v474
    %v514 = vunpack.c.l.b16 %v475
    %v515 = vunpack.c.l.b16 %v476
    %v516 = vunpack.c.l.b16 %v477
    %v517 = vunpack.c.l.b16 %v478
    %v518 = vunpack.c.l.b16 %v479
    %v519 = vunpack.c.l.b16 %v480
    %v520 = vunpack.c.l.b16 %v481
    %v521 = vunpack.c.l.b16 %v482
    %v522 = vunpack.c.l.b16 %v483
    %v523 = vunpack.c.l.b16 %v484
    %v524 = vpack.c.b16 %v509, %v508
    %v525 = vpack.c.b16 %v511, %v510
    %v526 = vpack.c.b16 %v513, %v512
    %v527 = vpack.c.b16 %v515, %v514
    %v528 = vpack.c.b16 %v517, %v516
    %v529 = vpack.c.b16 %v519, %v518
    %v530 = vpack.c.b16 %v521, %v520
    %v531 = vpack.c.b16 %v523, %v522
    %540 = vmatprep.subr.bf16.mxu0 0
    %541 = vmatpush1.bf16.msra.mxu0 %v524
    %542 = vmatprep.subr.bf16.mxu0 0
    %543 = vmatpush1.bf16.msra.mxu0 %v525
    %544 = vmatprep.subr.bf16.mxu0 0
    %545 = vmatpush1.bf16.msra.mxu0 %v526
    %546 = vmatprep.subr.bf16.mxu0 0
    %547 = vmatpush1.bf16.msra.mxu0 %v527
    %548 = vmatprep.subr.bf16.mxu0 0
    %549 = vmatpush1.bf16.msra.mxu0 %v528
    %550 = vmatprep.subr.bf16.mxu0 0
    %551 = vmatpush1.bf16.msra.mxu0 %v529
    %552 = vmatprep.subr.bf16.mxu0 0
    %553 = vmatpush1.bf16.msra.mxu0 %v530
    %554 = vmatprep.subr.bf16.mxu0 0
    %555 = vmatpush1.bf16.msra.mxu0 %v531
    %556 = vmatprep.subr.bf16.mxu0 0
    %557 = vmatpush1.bf16.msra.mxu0 0
    %558 = vmatprep.subr.bf16.mxu0 0
    %559 = vmatpush1.bf16.msra.mxu0 0
    %560 = vmatprep.subr.bf16.mxu0 0
    %561 = vmatpush1.bf16.msra.mxu0 0
    %562 = vmatprep.subr.bf16.mxu0 0
    %563 = vmatpush1.bf16.msra.mxu0 0
    %564 = vmatprep.subr.bf16.mxu0 0
    %565 = vmatpush1.bf16.msra.mxu0 0
    %566 = vmatprep.subr.bf16.mxu0 0
    %567 = vmatpush1.bf16.msra.mxu0 0
    %568 = vmatprep.subr.bf16.mxu0 0
    %569 = vmatpush1.bf16.msra.mxu0 0
    %570 = vmatprep.subr.bf16.mxu0 0
    %571 = vmatpush1.bf16.msra.mxu0 0
    %572 = vmatprep.mubr.bf16.mxu0 0
    %573 = vmatmul.mubr.bf16.gmra.mrb[0].mxu0 %v468
    %v574 = vpop.f32.mrb[0].mxu0
    %v575 = vadd.f32 %v490, %v574
    %v576 = vpop.f32.mrb[0].mxu0
    %v577 = vpop.f32.mrb[0].mxu0
    %v578 = vpop.f32.mrb[0].mxu0
    %579 = vdwg.mxu0
    %v580 = vmax.f32 %v575, 0.0
    %v581 = vpack.c.bf16 %v580, %v580
    %v582 = vld [vmem:[%s9] sm:$0xf]
    %v583 = vld [vmem:[%s9 + $0x4] sm:$0xf]
    %v584 = vld [vmem:[%s9 + $0x8] sm:$0xf]
    %v585 = vld [vmem:[%s9 + $0xc] sm:$0xf]
    %v586 = vld [vmem:[%s9 + $0x10] sm:$0xf]
    %v587 = vld [vmem:[%s9 + $0x14] sm:$0xf]
    %v588 = vld [vmem:[%s9 + $0x18] sm:$0xf]
    %v589 = vld [vmem:[%s9 + $0x1c] sm:$0xf]
    %v590 = vld [vmem:[%s9 + $0x20] sm:$0xf]
    %v591 = vld [vmem:[%s9 + $0x24] sm:$0xf]
    %v592 = vld [vmem:[%s9 + $0x28] sm:$0xf]
    %v593 = vld [vmem:[%s9 + $0x2c] sm:$0xf]
    %v594 = vld [vmem:[%s9 + $0x30] sm:$0xf]
    %v595 = vld [vmem:[%s9 + $0x34] sm:$0xf]
    %v596 = vld [vmem:[%s9 + $0x38] sm:$0xf]
    %v597 = vld [vmem:[%s9 + $0x3c] sm:$0xf]
    %v598 = vld [vmem:[%s10] sm:$0x1]
    %v600 = vlaneseq
    %v601 = vshrl.u32 %v600, 7
    %v602 = vsub.s32 0, %v601
    %v603 = vrot.slane %v598, %v602
    %v621 = vunpack.c.l.b16 %v582
    %v622 = vunpack.c.l.b16 %v583
    %v623 = vunpack.c.l.b16 %v584
    %v624 = vunpack.c.l.b16 %v585
    %v625 = vunpack.c.l.b16 %v586
    %v626 = vunpack.c.l.b16 %v587
    %v627 = vunpack.c.l.b16 %v588
    %v628 = vunpack.c.l.b16 %v589
    %v629 = vunpack.c.l.b16 %v590
    %v630 = vunpack.c.l.b16 %v591
    %v631 = vunpack.c.l.b16 %v592
    %v632 = vunpack.c.l.b16 %v593
    %v633 = vunpack.c.l.b16 %v594
    %v634 = vunpack.c.l.b16 %v595
    %v635 = vunpack.c.l.b16 %v596
    %v636 = vunpack.c.l.b16 %v597
    %v637 = vpack.c.b16 %v622, %v621
    %v638 = vpack.c.b16 %v624, %v623
    %v639 = vpack.c.b16 %v626, %v625
    %v640 = vpack.c.b16 %v628, %v627
    %v641 = vpack.c.b16 %v630, %v629
    %v642 = vpack.c.b16 %v632, %v631
    %v643 = vpack.c.b16 %v634, %v633
    %v644 = vpack.c.b16 %v636, %v635
    %653 = vmatprep.subr.bf16.mxu0 0
    %654 = vmatpush1.bf16.msra.mxu0 %v637
    %655 = vmatprep.subr.bf16.mxu0 0
    %656 = vmatpush1.bf16.msra.mxu0 %v638
    %657 = vmatprep.subr.bf16.mxu0 0
    %658 = vmatpush1.bf16.msra.mxu0 %v639
    %659 = vmatprep.subr.bf16.mxu0 0
    %660 = vmatpush1.bf16.msra.mxu0 %v640
    %661 = vmatprep.subr.bf16.mxu0 0
    %662 = vmatpush1.bf16.msra.mxu0 %v641
    %663 = vmatprep.subr.bf16.mxu0 0
    %664 = vmatpush1.bf16.msra.mxu0 %v642
    %665 = vmatprep.subr.bf16.mxu0 0
    %666 = vmatpush1.bf16.msra.mxu0 %v643
    %667 = vmatprep.subr.bf16.mxu0 0
    %668 = vmatpush1.bf16.msra.mxu0 %v644
    %669 = vmatprep.subr.bf16.mxu0 0
    %670 = vmatpush1.bf16.msra.mxu0 0
    %671 = vmatprep.subr.bf16.mxu0 0
    %672 = vmatpush1.bf16.msra.mxu0 0
    %673 = vmatprep.subr.bf16.mxu0 0
    %674 = vmatpush1.bf16.msra.mxu0 0
    %675 = vmatprep.subr.bf16.mxu0 0
    %676 = vmatpush1.bf16.msra.mxu0 0
    %677 = vmatprep.subr.bf16.mxu0 0
    %678 = vmatpush1.bf16.msra.mxu0 0
    %679 = vmatprep.subr.bf16.mxu0 0
    %680 = vmatpush1.bf16.msra.mxu0 0
    %681 = vmatprep.subr.bf16.mxu0 0
    %682 = vmatpush1.bf16.msra.mxu0 0
    %683 = vmatprep.subr.bf16.mxu0 0
    %684 = vmatpush1.bf16.msra.mxu0 0
    %685 = vmatprep.mubr.bf16.mxu0 0
    %686 = vmatmul.mubr.bf16.gmra.mrb[0].mxu0 %v581
    %v687 = vpop.f32.mrb[0].mxu0
    %v688 = vadd.f32 %v603, %v687
    %v689 = vpop.f32.mrb[0].mxu0
    %v690 = vpop.f32.mrb[0].mxu0
    %v691 = vpop.f32.mrb[0].mxu0
    %692 = vdwg.mxu0
    %v693 = vxor.u32 %v688, 2147483648
    %v694 = vmul.f32 %v693, 1.442695
    %v695 = vpow.pop %v694
    %v696 = vadd.f32 %v695, 1.0
    %v697 = vrcp.pop %v696
    %v698 = vmul.f32 1.0, %v697
    %699 = vst.msk [vmem:[#allocation7] sm:$0xff] %vm93, %v698
    // Predicated region
    $region54: #{tpu_custom_call.1} parent=1 // pred_check
      _
    $region55: #{tpu_custom_call.1} parent=1 // pred_check_branch
      %701 = sbr.rel (0) target = $region57
    $region56: #{tpu_custom_call.1} parent=1 // pred_region
      %s703 = ssub.s32 128, 128
      %704 = vsyncadd [#allocation4], %s703
      %s706 = sshll.u32 [#allocation7], 4
      %s707 = int_to_ptr.vmem [resolvable:$true] %s706
      %709 = dma.vmem_to_hbm [thread:$0]  %s707, 128, %s11, [#allocation4]
    $region57: #{tpu_custom_call.1} parent=1 // pred_fallthru
      _
    // Predicated region
    $region58: #{tpu_custom_call.1} parent=1 // pred_check
      _
    $region59: #{tpu_custom_call.1} parent=1 // pred_check_branch
      %711 = sbr.rel (0) target = $region61
    $region60: #{tpu_custom_call.1} parent=1 // pred_region
      %712 = dma.done [#allocation4], 128
    $region61: #{tpu_custom_call.1} parent=1 // pred_fallthru
      _
    %713 = vsyncpa [#allocation3], 1
    %714 = vsyncpa [#allocation6], 1
    %715 = vsyncpa [#allocation4], 1

</llo_original>
